<compile_context>
chip_gen: v6e
topology: v6e:2x2x1
jax: 0.10.0
libtpu: 0.0.40
codegen_flags: <defaults>
</compile_context>

<pallas_src>
import jax
import jax.numpy as jnp
from jax.experimental import pallas as pl
from jax.experimental.pallas import tpu as pltpu


def _round_up(x, m):
    return ((x + m - 1) // m) * m


def _gather_rows_kernel(idx_ref, table_ref, o_ref):
    # idx_ref:   SMEM (n_pad,) int32 — flattened, clamped, padded group ids
    #            (scalar-prefetched; readable by every grid step).
    # table_ref: VMEM (number_group, emb_dim) — whole table, grid-invariant,
    #            DMA'd from HBM once and resident across all steps.
    # o_ref:     VMEM (R, emb_dim) — this step's slab of gathered rows.
    rows = o_ref.shape[0]
    base = pl.program_id(0) * rows

    def body(r, carry):
        row = idx_ref[base + r]                     # scalar load from SMEM
        o_ref[pl.ds(r, 1), :] = table_ref[pl.ds(row, 1), :]
        return carry

    jax.lax.fori_loop(0, rows, body, 0, unroll=True if rows <= 32 else 8)


def group_embedding(num_group, table, *, max_rows_per_step=512):
    """Pallas embedding lookup: returns num_group.shape + (embedding_dim,)."""
    num_groups, emb_dim = table.shape

    # Clamp ids so an out-of-range value can never index outside the table
    # (nn.Embedding would raise; clamping is the safe in-kernel behaviour).
    idx = jnp.clip(num_group.reshape(-1).astype(jnp.int32), 0, num_groups - 1)
    n = idx.shape[0]

    # Rows per grid step: multiple of 8 (sublane tile), capped, and chosen so
    # the grid has >= 2 steps when n allows (v7x megacore gets both TCs busy).
    rows_per_step = int(min(max_rows_per_step,
                            max(8, _round_up(pl.cdiv(n, 2), 8))))
    n_pad = _round_up(n, rows_per_step)
    if n_pad != n:
        idx = jnp.pad(idx, (0, n_pad - n))          # pad rows gather row 0
    grid = n_pad // rows_per_step

    # VMEM budget (re-derived per chip: v5e/v6e 128 MiB, v7x only 64 MiB).
    itemsize = jnp.dtype(table.dtype).itemsize
    table_bytes = num_groups * emb_dim * itemsize
    out_block_bytes = rows_per_step * emb_dim * itemsize
    try:
        vmem_capacity = int(pltpu.get_tpu_info().vmem_capacity_bytes)
    except Exception:
        vmem_capacity = 64 * 1024 * 1024            # conservative (v7x per-TC)

    vmem_needed = 2 * table_bytes + 2 * out_block_bytes + (2 << 20)
    if vmem_needed > vmem_capacity - (8 << 20):
        # TODO(synk): batched manual-DMA HBM gather path (pl.ANY table +
        # make_async_copy, several row DMAs in flight) for tables too large to
        # be VMEM-resident; plain XLA gather is used for that regime for now.
        return jnp.take(table, num_group, axis=0)

    vmem_limit = int(min(vmem_capacity, max(32 << 20, vmem_needed + (8 << 20))))

    out_flat = pl.pallas_call(
        _gather_rows_kernel,
        out_shape=jax.ShapeDtypeStruct((n_pad, emb_dim), table.dtype),
        grid_spec=pltpu.PrefetchScalarGridSpec(
            num_scalar_prefetch=1,                  # idx -> SMEM before grid
            grid=(grid,),
            in_specs=[
                # Whole table as one block, resident in VMEM for all steps.
                pl.BlockSpec((num_groups, emb_dim), lambda i, idx_ref: (0, 0)),
            ],
            out_specs=pl.BlockSpec((rows_per_step, emb_dim),
                                   lambda i, idx_ref: (i, 0)),
        ),
        compiler_params=pltpu.CompilerParams(
            dimension_semantics=("parallel",),
            vmem_limit_bytes=vmem_limit,
        ),
    )(idx, table)

    # TODO(synk): when emb_dim < 128 and divides 128, pack 128/emb_dim gathered
    # rows per 128-lane output row (lane-dense out_spec, unmasked vst); for
    # production prefer embedding_dim to be a multiple of 128.
    return out_flat[:n].reshape(num_group.shape + (emb_dim,))


def _reference(num_group, table):
    """Pure-JAX reference mirroring the PyTorch nn.Embedding forward."""
    return jnp.take(table, num_group, axis=0)


if __name__ == "__main__":
    number_group, embedding_dim = 16, 32

    key = jax.random.PRNGKey(0)
    k_table, k_idx1, k_idx2 = jax.random.split(key, 3)

    # nn.Embedding default init: weight ~ N(0, 1).
    table = jax.random.normal(
        k_table, (number_group, embedding_dim), jnp.float32)

    # (batch=2, seq=8) ids — exercises the multi-step grid (n=16 -> 2 steps of 8).
    ids_a = jax.random.randint(k_idx1, (2, 8), 0, number_group, jnp.int32)
    out_a = jax.block_until_ready(group_embedding(ids_a, table))
    ref_a = _reference(ids_a, table)
    assert out_a.shape == (2, 8, embedding_dim)
    assert jnp.array_equal(out_a, ref_a)

    # (3, 5) ids — exercises the padding path (n=15 padded to 16).
    ids_b = jax.random.randint(k_idx2, (3, 5), 0, number_group, jnp.int32)
    out_b = jax.block_until_ready(group_embedding(ids_b, table))
    ref_b = _reference(ids_b, table)
    assert out_b.shape == (3, 5, embedding_dim)
    assert jnp.array_equal(out_b, ref_b)

    print("KERNEL_OK")
</pallas_src>

<mosaic_0001>
module attributes {stable_mosaic.version = 11 : i64} {
  func.func @_gather_rows_kernel(%arg0: i32, %arg1: memref<16xi32, #tpu.memory_space<smem>>, %arg2: memref<16x32xf32, #tpu.memory_space<vmem>>, %arg3: memref<8x32xf32, #tpu.memory_space<vmem>>) attributes {dimension_semantics = [#tpu.dimension_semantics<parallel>], iteration_bounds = array<i64: 2>, scalar_prefetch = 1 : i64, scratch_operands = 0 : i64, tpu.core_type = #tpu.core_type<tc>, window_params = [{pipeline_mode = #tpu.pipeline_mode<synchronous>, transform_indices = @transform_0, window_bounds = array<i64: 16, 32>}, {transform_indices = @transform_1, window_bounds = array<i64: 8, 32>}]} {
    %c8_i32 = arith.constant 8 : i32
    %0 = arith.muli %arg0, %c8_i32 : i32
    %c0_i32 = arith.constant 0 : i32
    %1 = arith.addi %0, %c0_i32 : i32
    %2 = arith.index_cast %1 : i32 to index
    %3 = memref.load %arg1[%2] : memref<16xi32, #tpu.memory_space<smem>>
    %4 = arith.index_cast %3 : i32 to index
    %c0 = arith.constant 0 : index
    %5 = vector.load %arg2[%4, %c0] : memref<16x32xf32, #tpu.memory_space<vmem>>, vector<1x32xf32>
    %6 = arith.index_cast %c0_i32 : i32 to index
    %c0_0 = arith.constant 0 : index
    %7 = vector.load %arg3[%6, %c0_0] : memref<8x32xf32, #tpu.memory_space<vmem>>, vector<1x32xf32>
    tpu.vector_store %arg3[%6, %c0_0], %5 {strides = array<i32>} : memref<8x32xf32, #tpu.memory_space<vmem>>, vector<1x32xf32>,
    %c1_i32 = arith.constant 1 : i32
    %8 = arith.addi %0, %c1_i32 : i32
    %9 = arith.index_cast %8 : i32 to index
    %10 = memref.load %arg1[%9] : memref<16xi32, #tpu.memory_space<smem>>
    %11 = arith.index_cast %10 : i32 to index
    %c0_1 = arith.constant 0 : index
    %12 = vector.load %arg2[%11, %c0_1] : memref<16x32xf32, #tpu.memory_space<vmem>>, vector<1x32xf32>
    %13 = arith.index_cast %c1_i32 : i32 to index
    %c0_2 = arith.constant 0 : index
    %14 = vector.load %arg3[%13, %c0_2] : memref<8x32xf32, #tpu.memory_space<vmem>>, vector<1x32xf32>
    tpu.vector_store %arg3[%13, %c0_2], %12 {strides = array<i32>} : memref<8x32xf32, #tpu.memory_space<vmem>>, vector<1x32xf32>,
    %c2_i32 = arith.constant 2 : i32
    %15 = arith.addi %0, %c2_i32 : i32
    %16 = arith.index_cast %15 : i32 to index
    %17 = memref.load %arg1[%16] : memref<16xi32, #tpu.memory_space<smem>>
    %18 = arith.index_cast %17 : i32 to index
    %c0_3 = arith.constant 0 : index
    %19 = vector.load %arg2[%18, %c0_3] : memref<16x32xf32, #tpu.memory_space<vmem>>, vector<1x32xf32>
    %20 = arith.index_cast %c2_i32 : i32 to index
    %c0_4 = arith.constant 0 : index
    %21 = vector.load %arg3[%20, %c0_4] : memref<8x32xf32, #tpu.memory_space<vmem>>, vector<1x32xf32>
    tpu.vector_store %arg3[%20, %c0_4], %19 {strides = array<i32>} : memref<8x32xf32, #tpu.memory_space<vmem>>, vector<1x32xf32>,
    %c3_i32 = arith.constant 3 : i32
    %22 = arith.addi %0, %c3_i32 : i32
    %23 = arith.index_cast %22 : i32 to index
    %24 = memref.load %arg1[%23] : memref<16xi32, #tpu.memory_space<smem>>
    %25 = arith.index_cast %24 : i32 to index
    %c0_5 = arith.constant 0 : index
    %26 = vector.load %arg2[%25, %c0_5] : memref<16x32xf32, #tpu.memory_space<vmem>>, vector<1x32xf32>
    %27 = arith.index_cast %c3_i32 : i32 to index
    %c0_6 = arith.constant 0 : index
    %28 = vector.load %arg3[%27, %c0_6] : memref<8x32xf32, #tpu.memory_space<vmem>>, vector<1x32xf32>
    tpu.vector_store %arg3[%27, %c0_6], %26 {strides = array<i32>} : memref<8x32xf32, #tpu.memory_space<vmem>>, vector<1x32xf32>,
    %c4_i32 = arith.constant 4 : i32
    %29 = arith.addi %0, %c4_i32 : i32
    %30 = arith.index_cast %29 : i32 to index
    %31 = memref.load %arg1[%30] : memref<16xi32, #tpu.memory_space<smem>>
    %32 = arith.index_cast %31 : i32 to index
    %c0_7 = arith.constant 0 : index
    %33 = vector.load %arg2[%32, %c0_7] : memref<16x32xf32, #tpu.memory_space<vmem>>, vector<1x32xf32>
    %34 = arith.index_cast %c4_i32 : i32 to index
    %c0_8 = arith.constant 0 : index
    %35 = vector.load %arg3[%34, %c0_8] : memref<8x32xf32, #tpu.memory_space<vmem>>, vector<1x32xf32>
    tpu.vector_store %arg3[%34, %c0_8], %33 {strides = array<i32>} : memref<8x32xf32, #tpu.memory_space<vmem>>, vector<1x32xf32>,
    %c5_i32 = arith.constant 5 : i32
    %36 = arith.addi %0, %c5_i32 : i32
    %37 = arith.index_cast %36 : i32 to index
    %38 = memref.load %arg1[%37] : memref<16xi32, #tpu.memory_space<smem>>
    %39 = arith.index_cast %38 : i32 to index
    %c0_9 = arith.constant 0 : index
    %40 = vector.load %arg2[%39, %c0_9] : memref<16x32xf32, #tpu.memory_space<vmem>>, vector<1x32xf32>
    %41 = arith.index_cast %c5_i32 : i32 to index
    %c0_10 = arith.constant 0 : index
    %42 = vector.load %arg3[%41, %c0_10] : memref<8x32xf32, #tpu.memory_space<vmem>>, vector<1x32xf32>
    tpu.vector_store %arg3[%41, %c0_10], %40 {strides = array<i32>} : memref<8x32xf32, #tpu.memory_space<vmem>>, vector<1x32xf32>,
    %c6_i32 = arith.constant 6 : i32
    %43 = arith.addi %0, %c6_i32 : i32
    %44 = arith.index_cast %43 : i32 to index
    %45 = memref.load %arg1[%44] : memref<16xi32, #tpu.memory_space<smem>>
    %46 = arith.index_cast %45 : i32 to index
    %c0_11 = arith.constant 0 : index
    %47 = vector.load %arg2[%46, %c0_11] : memref<16x32xf32, #tpu.memory_space<vmem>>, vector<1x32xf32>
    %48 = arith.index_cast %c6_i32 : i32 to index
    %c0_12 = arith.constant 0 : index
    %49 = vector.load %arg3[%48, %c0_12] : memref<8x32xf32, #tpu.memory_space<vmem>>, vector<1x32xf32>
    tpu.vector_store %arg3[%48, %c0_12], %47 {strides = array<i32>} : memref<8x32xf32, #tpu.memory_space<vmem>>, vector<1x32xf32>,
    %c7_i32 = arith.constant 7 : i32
    %50 = arith.addi %0, %c7_i32 : i32
    %51 = arith.index_cast %50 : i32 to index
    %52 = memref.load %arg1[%51] : memref<16xi32, #tpu.memory_space<smem>>
    %53 = arith.index_cast %52 : i32 to index
    %c0_13 = arith.constant 0 : index
    %54 = vector.load %arg2[%53, %c0_13] : memref<16x32xf32, #tpu.memory_space<vmem>>, vector<1x32xf32>
    %55 = arith.index_cast %c7_i32 : i32 to index
    %c0_14 = arith.constant 0 : index
    %56 = vector.load %arg3[%55, %c0_14] : memref<8x32xf32, #tpu.memory_space<vmem>>, vector<1x32xf32>
    tpu.vector_store %arg3[%55, %c0_14], %54 {strides = array<i32>} : memref<8x32xf32, #tpu.memory_space<vmem>>, vector<1x32xf32>,
    %c8_i32_15 = arith.constant 8 : i32
    return
  }
  func.func @transform_0(%arg0: i32, %arg1: memref<16xi32, #tpu.memory_space<smem>>) -> (i32, i32) {
    %c0_i32 = arith.constant 0 : i32
    %c0_i32_0 = arith.constant 0 : i32
    %c0_i32_1 = arith.constant 0 : i32
    return %c0_i32, %c0_i32_0 : i32, i32
  }
  func.func @transform_1(%arg0: i32, %arg1: memref<16xi32, #tpu.memory_space<smem>>) -> (i32, i32) {
    %c0_i32 = arith.constant 0 : i32
    %c0_i32_0 = arith.constant 0 : i32
    return %arg0, %c0_i32 : i32, i32
  }
}

</mosaic_0001>

<llo_original>
// kernel: tpu_custom_call.1
$region0: #{tpu_custom_call.1}
  #allocation0 [shape = 'u32[]', space=smem, size = 0x4, offset = 0x4, fixed_abs, tag = 'smem constant byte address 0x4 - core index']
  #allocation1 [shape = 'u32[144,128]{1,0:T(1,128)}', space=vmem, size = 0x12000, scoped, tag = 'internal scratch']
  #allocation2 [shape = 's32[1]{0}', space=sflag, size = 0x4, scoped, tag = 'scoped memory for tpu_custom_call.1']
  #allocation3 [shape = 'u8[512]{0}', space=smem, size = 0x200, scoped, tag = 'prefetched SMEM operand 0']
  %s0 = inlined_call_operand.hbm [shape: s32[16], index: 0, kind: input, shape index: {}]
  %s1 = inlined_call_operand.hbm [shape: f32[16,32], index: 1, kind: input, shape index: {}]
  %s2 = inlined_call_operand.hbm [shape: f32[16,32], index: 2, kind: output, shape index: {}]
  %s3 = sld [smem:[#allocation0]]
  $region41: #{tpu_custom_call.1} parent=0
    _
  %s5 = ssub.s32 1, %s3
  %s6 = scalar_select 0, %s5, %s3
  %8 = dma.hbm_to_smem %s0, 16, [#allocation3], [#allocation2]
  %9 = dma.done [#allocation2], 16
  %10 = sfence
  $region1: #{tpu_custom_call.1} parent=0
    #allocation4 [shape = 'u8[8192]{0}', space=vmem, size = 0x2000, scoped, tag = 'input window, operand 1, single buffered']
    #allocation5 [shape = 's32[2]{0}', space=sflag, size = 0x8, scoped, tag = 'scoped memory for tpu_custom_call.1']
    #allocation6 [shape = 's32[2]{0}', space=sflag, size = 0x8, scoped, tag = 'scoped memory for tpu_custom_call.1']
    #allocation7 [shape = 'u8[8192]{0}', space=vmem, size = 0x2000, scoped, tag = 'output window, operand 0']
    %11 = vsyncpa [#allocation5], 0
    %12 = vsyncpa [#allocation6], 0
    %s13 = scalar_lea.sflag [#allocation6], 1
    %14 = vsyncpa %s13, 0
    loop: start=0, step=1, limit=4
    $region2: #{tpu_custom_call.1} parent=1 // loop_pre_header
      _
    $region3: #{tpu_custom_call.1} parent=1 // loop_header
      %s16 = sphi 0, %s20
      %p17 = scmp.ge.s32.totalorder %s16, 4
      %s24 = sphi 0, %s24
      %s26 = sphi 0, %s24
      %s27 = sphi 0, %s26
      %s41 = sphi 0, %s27
      %s47 = sphi 0, %s49
      %s50 = sphi 0, %s47
      %s51 = sphi 0, %s50
      %s67 = sphi 0, %s51
    $region4: #{tpu_custom_call.1} parent=1 // loop_header_branch
      %19 = sbr.rel (%p17) target = $region8
    $region5: #{tpu_custom_call.1} parent=1 // loop_body
      %s21 = ssub.s32 %s16, 1
      %s22 = ssub.s32 %s16, 2
      %s23 = sadd.s32 %s16, 1
      %s25 = sadd.s32 %s24, 1
      %p28 = scmp.eq.s32.totalorder %s16, 1
      %p29 = scmp.ne.s32.totalorder %s24, %s26
      %p30 = scmp.eq.s32.totalorder %s16, 0
      %p31 = por %p29, %p30
      %p32 = scmp.ne.s32.totalorder %s24, %s26
      %p33 = scmp.eq.s32.totalorder %s21, 1
      %p34 = por %p32, %p33
      %p35 = scmp.ne.s32.totalorder %s26, %s27
      %p36 = scmp.eq.s32.totalorder %s21, 0
      %p37 = por %p35, %p36
      %p38 = scmp.ne.s32.totalorder %s26, %s27
      %p39 = scmp.eq.s32.totalorder %s22, 1
      %p40 = por %p38, %p39
      %p42 = scmp.ne.s32.totalorder %s27, %s41
      %p43 = scmp.eq.s32.totalorder %s22, 0
      %p44 = por %p42, %p43
      %s45 = ssub.s32 %s16, %s23
      %p46 = scmp.eq.s32.totalorder %s45, 0
      %s48 = sadd.s32 %s47, 1
      %s49 = scalar_select %p46, %s47, %s48
      %p52 = pneg %p46
      %p53 = scmp.eq.s32.totalorder %s16, 1
      %p54 = por %p52, %p53
      %p55 = scmp.ne.s32.totalorder %s47, %s50
      %p56 = scmp.eq.s32.totalorder %s16, 0
      %p57 = por %p55, %p56
      %p58 = scmp.ne.s32.totalorder %s47, %s50
      %p59 = scmp.eq.s32.totalorder %s21, 1
      %p60 = por %p58, %p59
      %p61 = scmp.ne.s32.totalorder %s50, %s51
      %p62 = scmp.eq.s32.totalorder %s21, 0
      %p63 = por %p61, %p62
      %p64 = scmp.ne.s32.totalorder %s50, %s51
      %p65 = scmp.eq.s32.totalorder %s22, 1
      %p66 = por %p64, %p65
      %p68 = scmp.ne.s32.totalorder %s51, %s67
      %p69 = scmp.eq.s32.totalorder %s22, 0
      %p70 = por %p68, %p69
      %p71 = scmp.le.s32.totalorder 1, %s16
      %p72 = scmp.lt.s32.totalorder %s16, 3
      %p73 = pnand %p71, %p72
      %p74 = pneg %p73
      // Predicated region
      $region9: #{tpu_custom_call.1} parent=5 // pred_check
        _
      $region10: #{tpu_custom_call.1} parent=5 // pred_check_branch
        %76 = sbr.rel (%p73) target = $region12
      $region11: #{tpu_custom_call.1} parent=5 // pred_region
        %s77 = ssub.s32 %s16, 1
        // Predicated region
        $region13: #{tpu_custom_call.1} parent=11 // pred_check
          %p78 = pneg %p37
        $region14: #{tpu_custom_call.1} parent=11 // pred_check_branch
          %80 = sbr.rel (%p78) target = $region16
        $region15: #{tpu_custom_call.1} parent=11 // pred_region
          %s82 = ssub.s32 256, 256
          %83 = vsyncadd [#allocation5], %s82
          %s84 = sshll.u32 [#allocation4], 4
          %s85 = int_to_ptr.vmem [resolvable:$true] %s84
          %90 = dma.hbm_to_vmem [thread:$0]  %s1, 256, %s85, [#allocation5], 128, 128, 8
        $region16: #{tpu_custom_call.1} parent=11 // pred_fallthru
          _
      $region12: #{tpu_custom_call.1} parent=5 // pred_fallthru
        _
      %p91 = scmp.lt.s32.totalorder %s16, 2
      // Predicated region
      $region17: #{tpu_custom_call.1} parent=5 // pred_check
        %p92 = pneg %p91
      $region18: #{tpu_custom_call.1} parent=5 // pred_check_branch
        %94 = sbr.rel (%p92) target = $region20
      $region19: #{tpu_custom_call.1} parent=5 // pred_region
        _
      $region20: #{tpu_custom_call.1} parent=5 // pred_fallthru
        _
      %p95 = scmp.le.s32.totalorder 1, %s16
      %p96 = scmp.lt.s32.totalorder %s16, 3
      %p97 = pnand %p95, %p96
      %p98 = pneg %p97
      // Predicated region
      $region21: #{tpu_custom_call.1} parent=5 // pred_check
        _
      $region22: #{tpu_custom_call.1} parent=5 // pred_check_branch
        %100 = sbr.rel (%p97) target = $region24
      $region23: #{tpu_custom_call.1} parent=5 // pred_region
        %s101 = ssub.s32 %s16, 1
        // Predicated region
        $region25: #{tpu_custom_call.1} parent=23 // pred_check
          %p102 = pneg %p37
        $region26: #{tpu_custom_call.1} parent=23 // pred_check_branch
          %104 = sbr.rel (%p102) target = $region28
        $region27: #{tpu_custom_call.1} parent=23 // pred_region
          %105 = dma.done [#allocation5], 256
        $region28: #{tpu_custom_call.1} parent=23 // pred_fallthru
          _
        %p106 = pneg %p37
        %p107 = pneg %p34
        %p108 = pneg %p63
        %p109 = pneg %p60
        %s110 = sand.u32 %s50, 1
        %s111 = scalar_lea.sflag [#allocation6], %s110
        %s112 = sand.u32 %s50, 1
        %s113 = smul.addr %s112, 8
        %s114 = scalar_lea.vmem [#allocation7], %s113
        %s115 = smul.u32 %s21, 8
        %s116 = sld [smem:[#allocation3 + %s115]]
        %s117 = scalar_lea.vmem [#allocation4], %s116
        %v118 = vld [vmem:[%s117] sm:$0x1]
        %vm119 = vcmask 253952
        %120 = vst.msk [vmem:[%s114] sm:$0x1] %vm119, %v118
        %s121 = sadd.s32 %s115, 1
        %s122 = sld [smem:[#allocation3 + %s121]]
        %s123 = scalar_lea.vmem [#allocation4], %s122
        %v124 = vld [vmem:[%s123] sm:$0x1]
        %125 = vst.msk [vmem:[%s114 + $0x1] sm:$0x1] %vm119, %v124
        %s126 = sadd.s32 %s115, 2
        %s127 = sld [smem:[#allocation3 + %s126]]
        %s128 = scalar_lea.vmem [#allocation4], %s127
        %v129 = vld [vmem:[%s128] sm:$0x1]
        %130 = vst.msk [vmem:[%s114 + $0x2] sm:$0x1] %vm119, %v129
        %s131 = sadd.s32 %s115, 3
        %s132 = sld [smem:[#allocation3 + %s131]]
        %s133 = scalar_lea.vmem [#allocation4], %s132
        %v134 = vld [vmem:[%s133] sm:$0x1]
        %135 = vst.msk [vmem:[%s114 + $0x3] sm:$0x1] %vm119, %v134
        %s136 = sadd.s32 %s115, 4
        %s137 = sld [smem:[#allocation3 + %s136]]
        %s138 = scalar_lea.vmem [#allocation4], %s137
        %v139 = vld [vmem:[%s138] sm:$0x1]
        %140 = vst.msk [vmem:[%s114 + $0x4] sm:$0x1] %vm119, %v139
        %s141 = sadd.s32 %s115, 5
        %s142 = sld [smem:[#allocation3 + %s141]]
        %s143 = scalar_lea.vmem [#allocation4], %s142
        %v144 = vld [vmem:[%s143] sm:$0x1]
        %145 = vst.msk [vmem:[%s114 + $0x5] sm:$0x1] %vm119, %v144
        %s146 = sadd.s32 %s115, 6
        %s147 = sld [smem:[#allocation3 + %s146]]
        %s148 = scalar_lea.vmem [#allocation4], %s147
        %v149 = vld [vmem:[%s148] sm:$0x1]
        %150 = vst.msk [vmem:[%s114 + $0x6] sm:$0x1] %vm119, %v149
        %s151 = sadd.s32 %s115, 7
        %s152 = sld [smem:[#allocation3 + %s151]]
        %s153 = scalar_lea.vmem [#allocation4], %s152
        %v154 = vld [vmem:[%s153] sm:$0x1]
        %155 = vst.msk [vmem:[%s114 + $0x7] sm:$0x1] %vm119, %v154
        %s156 = sand.u32 %s50, 1
        %s157 = scalar_lea.sflag [#allocation6], %s156
        %s158 = sand.u32 %s50, 1
        %s159 = smul.addr %s158, 8
        %s160 = scalar_lea.vmem [#allocation7], %s159
        // Predicated region
        $region29: #{tpu_custom_call.1} parent=23 // pred_check
          %p161 = pneg %p60
        $region30: #{tpu_custom_call.1} parent=23 // pred_check_branch
          %163 = sbr.rel (%p161) target = $region32
        $region31: #{tpu_custom_call.1} parent=23 // pred_region
          %s165 = ssub.s32 128, 128
          %166 = vsyncadd %s157, %s165
          %s167 = smul.addr %s21, 128
          %s168 = scalar_lea.hbm %s2, %s167
          %s170 = sshll.u32 %s160, 4
          %s171 = int_to_ptr.vmem [resolvable:$true] %s170
          %173 = dma.vmem_to_hbm [thread:$0]  %s171, 128, %s168, %s157
        $region32: #{tpu_custom_call.1} parent=23 // pred_fallthru
          _
      $region24: #{tpu_custom_call.1} parent=5 // pred_fallthru
        _
      %p174 = scmp.le.s32.totalorder 2, %s16
      // Predicated region
      $region33: #{tpu_custom_call.1} parent=5 // pred_check
        %p175 = pneg %p174
      $region34: #{tpu_custom_call.1} parent=5 // pred_check_branch
        %177 = sbr.rel (%p175) target = $region36
      $region35: #{tpu_custom_call.1} parent=5 // pred_region
        %s178 = ssub.s32 %s16, 2
        // Predicated region
        $region37: #{tpu_custom_call.1} parent=35 // pred_check
          %p179 = pneg %p66
        $region38: #{tpu_custom_call.1} parent=35 // pred_check_branch
          %181 = sbr.rel (%p179) target = $region40
        $region39: #{tpu_custom_call.1} parent=35 // pred_region
          %s182 = sand.u32 %s51, 1
          %s183 = scalar_lea.sflag [#allocation6], %s182
          %s184 = sand.u32 %s51, 1
          %s185 = smul.addr %s184, 8
          %s186 = scalar_lea.vmem [#allocation7], %s185
          %187 = dma.done %s183, 128
        $region40: #{tpu_custom_call.1} parent=35 // pred_fallthru
          _
      $region36: #{tpu_custom_call.1} parent=5 // pred_fallthru
        _
    $region6: #{tpu_custom_call.1} parent=1 // loop_footer
      %s20 = sadd.s32 1, %s16
    $region7: #{tpu_custom_call.1} parent=1 // loop_footer_branch
      %15 = sbr.rel target = $region3
    $region8: #{tpu_custom_call.1} parent=1 // loop_exit
      _
    %188 = vsyncpa [#allocation5], 1
    %s189 = scalar_lea.sflag [#allocation5], 1
    %190 = vsyncpa %s189, 1
    %191 = vsyncpa [#allocation6], 1
    %s192 = scalar_lea.sflag [#allocation6], 1
    %193 = vsyncpa %s192, 1

</llo_original>
